<compile_context>
chip_gen: v7x
topology: tpu7x:2x2x1
jax: 0.10.0
libtpu: 0.0.40
codegen_flags: <defaults>
</compile_context>

<pallas_src>
import jax
import jax.numpy as jnp
from jax.experimental import pallas as pl
from jax.experimental.pallas import tpu as pltpu


def _round_up(n, m):
    return (n + m - 1) // m * m


def binarycls_kernel(x_ref, w1_ref, b1_ref, w2_ref, b2_ref, w3_ref, b3_ref,
                     o_ref):
    # In-kernel cast: x arrives f32 (one HBM read), cast is a free VPU op.
    x = x_ref[...].astype(jnp.bfloat16)

    h1 = jnp.dot(x, w1_ref[...], preferred_element_type=jnp.float32)
    h1 = jnp.maximum(h1 + b1_ref[...], 0.0)

    h2 = jnp.dot(h1.astype(jnp.bfloat16), w2_ref[...],
                 preferred_element_type=jnp.float32)
    h2 = jnp.maximum(h2 + b2_ref[...], 0.0)

    logits = jnp.dot(h2.astype(jnp.bfloat16), w3_ref[...],
                     preferred_element_type=jnp.float32)
    logits = logits + b3_ref[...]

    # sigmoid (EUP), f32.
    z = jax.nn.sigmoid(logits)                    # (tile_b, 2)

    # Closed-form 2-class log_softmax with a single softplus:
    #   log p0 = -softplus(z1 - z0),  log p1 = log p0 + (z1 - z0)
    d = z[:, 1:2] - z[:, 0:1]
    out0 = -jax.nn.softplus(d)
    out1 = out0 + d                               # exact: -softplus(-d) = d - softplus(d)

    o_ref[...] = jnp.concatenate([out0, out1], axis=1).astype(o_ref.dtype)


def _choose_tile_b(B, block_b):
    # Rows must be a multiple of 8 (f32 sublanes) unless equal to the full
    # batch. Cap so the batch splits into >=2 grid steps where possible
    # (v7x: 2 TensorCores share the "parallel" axis); cap at block_b (256
    # fills a v6e/v7x MXU row pass; pass 128 on v5e if sweeping).
    tile = min(block_b, _round_up(pl.cdiv(B, 2), 8))
    tile = max(tile, 8)
    return min(tile, _round_up(B, 8))


def binarycls_forward(x, w1, b1, w2, b2, w3, b3, *, block_b=256):
    B, in_dim = x.shape
    hidden = w1.shape[1]
    out_dim = w3.shape[1]

    bf16, f32 = jnp.bfloat16, jnp.float32

    # Weights are cast once (tiny, stay resident in VMEM); biases / epilogue
    # stay f32 (v5e VPU/EUP has no bf16). x stays f32 — cast happens in-kernel.
    xf = x.astype(f32)
    w1b, w2b, w3b = w1.astype(bf16), w2.astype(bf16), w3.astype(bf16)
    b1f, b2f, b3f = b1.astype(f32), b2.astype(f32), b3.astype(f32)

    tile_b = _choose_tile_b(B, block_b)
    grid = (pl.cdiv(B, tile_b),)   # partial last block handled by Pallas

    # Weights/biases: full-extent blocks, index_map pinned to (0, 0) so they
    # are DMA'd once and stay resident across all grid steps.
    # NOTE: for hidden >~ 2048 on v7x (64 MiB VMEM), single-buffer these with
    # pipeline_mode=pl.Buffered(1) and re-derive vmem_limit_bytes.
    resident = lambda shape: pl.BlockSpec(shape, lambda i: (0, 0))

    # Advisory cost for XLA scheduling around the custom call.
    matmul_flops = 2 * B * (in_dim * hidden + hidden * hidden + hidden * out_dim)
    bytes_accessed = (4 * B * in_dim                                   # x (f32)
                      + 2 * (in_dim * hidden + hidden * hidden + hidden * out_dim)  # bf16 weights
                      + 4 * (2 * hidden + out_dim)                     # f32 biases
                      + 4 * B * out_dim)                               # out (f32)
    cost = pl.CostEstimate(flops=matmul_flops,
                           transcendentals=3 * B,   # 2 sigmoid + 1 softplus per row
                           bytes_accessed=bytes_accessed)

    out = pl.pallas_call(
        binarycls_kernel,
        out_shape=jax.ShapeDtypeStruct((B, out_dim), f32),
        grid=grid,
        in_specs=[
            pl.BlockSpec((tile_b, in_dim), lambda i: (i, 0)),    # x tile (f32)
            resident((in_dim, hidden)), resident((1, hidden)),   # w1, b1
            resident((hidden, hidden)), resident((1, hidden)),   # w2, b2
            resident((hidden, out_dim)), resident((1, out_dim)),  # w3, b3
        ],
        out_specs=pl.BlockSpec((tile_b, out_dim), lambda i: (i, 0)),
        compiler_params=pltpu.CompilerParams(
            dimension_semantics=("parallel",),        # batch axis: shard across TCs
            vmem_limit_bytes=32 * 1024 * 1024,        # explicit, safe on v5e/v6e/v7x
        ),
        cost_estimate=cost,
    )(xf, w1b, b1f, w2b, b2f, w3b, b3f)

    return out


def init_params(key, in_dim, hidden_dim):
    # Deterministic PyTorch-style init: U(-1/sqrt(fan_in), 1/sqrt(fan_in)).
    keys = jax.random.split(key, 6)

    def lin(kw, kb, fan_in, fan_out):
        bound = 1.0 / jnp.sqrt(fan_in)
        w = jax.random.uniform(kw, (fan_in, fan_out), jnp.float32, -bound, bound)
        b = jax.random.uniform(kb, (1, fan_out), jnp.float32, -bound, bound)
        return w, b

    w1, b1 = lin(keys[0], keys[1], in_dim, hidden_dim)
    w2, b2 = lin(keys[2], keys[3], hidden_dim, hidden_dim)
    w3, b3 = lin(keys[4], keys[5], hidden_dim, 2)
    return w1, b1, w2, b2, w3, b3


def reference_forward_f32(x, w1, b1, w2, b2, w3, b3):
    h1 = jnp.maximum(x @ w1 + b1, 0.0)
    h2 = jnp.maximum(h1 @ w2 + b2, 0.0)
    z = jax.nn.sigmoid(h2 @ w3 + b3)
    return jax.nn.log_softmax(z, axis=-1)


def reference_forward_bf16(x, w1, b1, w2, b2, w3, b3):
    # Mirrors the kernel's precision policy (bf16 matmul inputs, f32 accum).
    bf16, f32 = jnp.bfloat16, jnp.float32
    h1 = jnp.dot(x.astype(bf16), w1.astype(bf16), preferred_element_type=f32)
    h1 = jnp.maximum(h1 + b1, 0.0)
    h2 = jnp.dot(h1.astype(bf16), w2.astype(bf16), preferred_element_type=f32)
    h2 = jnp.maximum(h2 + b2, 0.0)
    logits = jnp.dot(h2.astype(bf16), w3.astype(bf16),
                     preferred_element_type=f32) + b3
    z = jax.nn.sigmoid(logits)
    return jax.nn.log_softmax(z, axis=-1)


if __name__ == "__main__":
    B, in_dim, hidden_dim = 8, 32, 32

    key = jax.random.PRNGKey(0)
    k_x, k_p = jax.random.split(key)
    x = jax.random.normal(k_x, (B, in_dim), jnp.float32)
    params = init_params(k_p, in_dim, hidden_dim)

    out = binarycls_forward(x, *params)
    out = jax.block_until_ready(out)

    assert out.shape == (B, 2)
    assert bool(jnp.all(jnp.isfinite(out)))

    # Tight check against a reference using the same bf16-matmul / f32-accum
    # policy; loose check against the pure-f32 PyTorch-equivalent math.
    ref_bf16 = reference_forward_bf16(x, *params)
    ref_f32 = reference_forward_f32(x, *params)
    assert jnp.allclose(out, ref_bf16, atol=1e-4, rtol=1e-4)
    assert jnp.allclose(out, ref_f32, atol=2e-2, rtol=2e-2)

    print("KERNEL_OK")
</pallas_src>

<mosaic_0001>
module attributes {stable_mosaic.version = 11 : i64} {
  func.func @binarycls_kernel(%arg0: i32, %arg1: memref<8x32xf32, #tpu.memory_space<vmem>>, %arg2: memref<32x32xbf16, #tpu.memory_space<vmem>>, %arg3: memref<1x32xf32, #tpu.memory_space<vmem>>, %arg4: memref<32x32xbf16, #tpu.memory_space<vmem>>, %arg5: memref<1x32xf32, #tpu.memory_space<vmem>>, %arg6: memref<32x2xbf16, #tpu.memory_space<vmem>>, %arg7: memref<1x2xf32, #tpu.memory_space<vmem>>, %arg8: memref<8x2xf32, #tpu.memory_space<vmem>>) attributes {dimension_semantics = [#tpu.dimension_semantics<parallel>], iteration_bounds = array<i64: 1>, scalar_prefetch = 0 : i64, scratch_operands = 0 : i64, tpu.core_type = #tpu.core_type<tc>, window_params = [{transform_indices = @transform_0, window_bounds = array<i64: 8, 32>}, {pipeline_mode = #tpu.pipeline_mode<synchronous>, transform_indices = @transform_1, window_bounds = array<i64: 32, 32>}, {pipeline_mode = #tpu.pipeline_mode<synchronous>, transform_indices = @transform_2, window_bounds = array<i64: 1, 32>}, {pipeline_mode = #tpu.pipeline_mode<synchronous>, transform_indices = @transform_3, window_bounds = array<i64: 32, 32>}, {pipeline_mode = #tpu.pipeline_mode<synchronous>, transform_indices = @transform_4, window_bounds = array<i64: 1, 32>}, {pipeline_mode = #tpu.pipeline_mode<synchronous>, transform_indices = @transform_5, window_bounds = array<i64: 32, 2>}, {pipeline_mode = #tpu.pipeline_mode<synchronous>, transform_indices = @transform_6, window_bounds = array<i64: 1, 2>}, {transform_indices = @transform_7, window_bounds = array<i64: 8, 2>}]} {
    %c0 = arith.constant 0 : index
    %c0_0 = arith.constant 0 : index
    %0 = vector.load %arg1[%c0, %c0_0] : memref<8x32xf32, #tpu.memory_space<vmem>>, vector<8x32xf32>
    %1 = arith.truncf %0 : vector<8x32xf32> to vector<8x32xbf16>
    %c0_1 = arith.constant 0 : index
    %c0_2 = arith.constant 0 : index
    %2 = vector.load %arg2[%c0_1, %c0_2] : memref<32x32xbf16, #tpu.memory_space<vmem>>, vector<32x32xbf16>
    %cst = arith.constant dense<0.000000e+00> : vector<8x32xf32>
    %3 = tpu.matmul %1, %2, %cst {dimension_numbers = #tpu.dot_dimension_numbers<[1], [0], [0], [1], [0, 0, 1, 1], [], []>} : vector<8x32xbf16>, vector<32x32xbf16>, vector<8x32xf32> -> vector<8x32xf32>
    %c0_3 = arith.constant 0 : index
    %c0_4 = arith.constant 0 : index
    %4 = vector.load %arg3[%c0_3, %c0_4] : memref<1x32xf32, #tpu.memory_space<vmem>>, vector<1x32xf32>
    %5 = vector.broadcast %4 : vector<1x32xf32> to vector<8x32xf32>
    %6 = arith.addf %3, %5 : vector<8x32xf32>
    %cst_5 = arith.constant 0.000000e+00 : f32
    %7 = vector.broadcast %cst_5 : f32 to vector<8x32xf32>
    %8 = arith.maximumf %6, %7 : vector<8x32xf32>
    %9 = arith.truncf %8 : vector<8x32xf32> to vector<8x32xbf16>
    %c0_6 = arith.constant 0 : index
    %c0_7 = arith.constant 0 : index
    %10 = vector.load %arg4[%c0_6, %c0_7] : memref<32x32xbf16, #tpu.memory_space<vmem>>, vector<32x32xbf16>
    %cst_8 = arith.constant dense<0.000000e+00> : vector<8x32xf32>
    %11 = tpu.matmul %9, %10, %cst_8 {dimension_numbers = #tpu.dot_dimension_numbers<[1], [0], [0], [1], [0, 0, 1, 1], [], []>} : vector<8x32xbf16>, vector<32x32xbf16>, vector<8x32xf32> -> vector<8x32xf32>
    %c0_9 = arith.constant 0 : index
    %c0_10 = arith.constant 0 : index
    %12 = vector.load %arg5[%c0_9, %c0_10] : memref<1x32xf32, #tpu.memory_space<vmem>>, vector<1x32xf32>
    %13 = vector.broadcast %12 : vector<1x32xf32> to vector<8x32xf32>
    %14 = arith.addf %11, %13 : vector<8x32xf32>
    %cst_11 = arith.constant 0.000000e+00 : f32
    %15 = vector.broadcast %cst_11 : f32 to vector<8x32xf32>
    %16 = arith.maximumf %14, %15 : vector<8x32xf32>
    %17 = arith.truncf %16 : vector<8x32xf32> to vector<8x32xbf16>
    %c0_12 = arith.constant 0 : index
    %c0_13 = arith.constant 0 : index
    %18 = vector.load %arg6[%c0_12, %c0_13] : memref<32x2xbf16, #tpu.memory_space<vmem>>, vector<32x2xbf16>
    %cst_14 = arith.constant dense<0.000000e+00> : vector<8x2xf32>
    %19 = tpu.matmul %17, %18, %cst_14 {dimension_numbers = #tpu.dot_dimension_numbers<[1], [0], [0], [1], [0, 0, 1, 1], [], []>} : vector<8x32xbf16>, vector<32x2xbf16>, vector<8x2xf32> -> vector<8x2xf32>
    %c0_15 = arith.constant 0 : index
    %c0_16 = arith.constant 0 : index
    %20 = vector.load %arg7[%c0_15, %c0_16] : memref<1x2xf32, #tpu.memory_space<vmem>>, vector<1x2xf32>
    %21 = vector.broadcast %20 : vector<1x2xf32> to vector<8x2xf32>
    %22 = arith.addf %19, %21 : vector<8x2xf32>
    %23 = arith.negf %22 : vector<8x2xf32>
    %24 = math.exp %23 : vector<8x2xf32>
    %cst_17 = arith.constant 1.000000e+00 : f32
    %25 = vector.broadcast %cst_17 : f32 to vector<8x2xf32>
    %26 = arith.addf %25, %24 : vector<8x2xf32>
    %27 = arith.divf %25, %26 : vector<8x2xf32>
    %28 = vector.extract_strided_slice %27 {offsets = [0, 1], sizes = [8, 1], strides = [1, 1]} : vector<8x2xf32> to vector<8x1xf32>
    %29 = vector.extract_strided_slice %27 {offsets = [0, 0], sizes = [8, 1], strides = [1, 1]} : vector<8x2xf32> to vector<8x1xf32>
    %30 = arith.subf %28, %29 : vector<8x1xf32>
    %cst_18 = arith.constant 0.000000e+00 : f32
    %31 = vector.broadcast %cst_18 : f32 to vector<8x1xf32>
    %32 = arith.maximumf %30, %31 : vector<8x1xf32>
    %33 = vector.broadcast %cst_18 : f32 to vector<8x1xf32>
    %34 = arith.subf %30, %33 : vector<8x1xf32>
    %35 = arith.cmpf one, %34, %34 : vector<8x1xf32>
    %36 = vector.broadcast %cst_18 : f32 to vector<8x1xf32>
    %37 = arith.addf %30, %36 : vector<8x1xf32>
    %38 = math.absf %34 : vector<8x1xf32>
    %cst_19 = arith.constant 0.000000e+00 : f32
    %39 = vector.broadcast %cst_19 : f32 to vector<8x1xf32>
    %40 = arith.subf %39, %38 : vector<8x1xf32>
    %41 = math.exp %40 : vector<8x1xf32>
    %42 = math.log1p %41 : vector<8x1xf32>
    %43 = arith.addf %32, %42 : vector<8x1xf32>
    %44 = arith.select %35, %37, %43 : vector<8x1xi1>, vector<8x1xf32>
    %cst_20 = arith.constant 0.000000e+00 : f32
    %45 = vector.broadcast %cst_20 : f32 to vector<8x1xf32>
    %46 = arith.subf %45, %44 : vector<8x1xf32>
    %47 = arith.addf %46, %30 : vector<8x1xf32>
    %48 = tpu.concatenate %46, %47 in 1 : vector<8x1xf32>, vector<8x1xf32> -> vector<8x2xf32>
    %c0_21 = arith.constant 0 : index
    %c0_22 = arith.constant 0 : index
    %49 = vector.load %arg8[%c0_21, %c0_22] : memref<8x2xf32, #tpu.memory_space<vmem>>, vector<8x2xf32>
    tpu.vector_store %arg8[%c0_21, %c0_22], %48 {strides = array<i32>} : memref<8x2xf32, #tpu.memory_space<vmem>>, vector<8x2xf32>,
    return
  }
  func.func @transform_0(%arg0: i32) -> (i32, i32) {
    %c0_i32 = arith.constant 0 : i32
    %c0_i32_0 = arith.constant 0 : i32
    return %arg0, %c0_i32 : i32, i32
  }
  func.func @transform_1(%arg0: i32) -> (i32, i32) {
    %c0_i32 = arith.constant 0 : i32
    %c0_i32_0 = arith.constant 0 : i32
    %c0_i32_1 = arith.constant 0 : i32
    return %c0_i32, %c0_i32_0 : i32, i32
  }
  func.func @transform_2(%arg0: i32) -> (i32, i32) {
    %c0_i32 = arith.constant 0 : i32
    %c0_i32_0 = arith.constant 0 : i32
    %c0_i32_1 = arith.constant 0 : i32
    return %c0_i32, %c0_i32_0 : i32, i32
  }
  func.func @transform_3(%arg0: i32) -> (i32, i32) {
    %c0_i32 = arith.constant 0 : i32
    %c0_i32_0 = arith.constant 0 : i32
    %c0_i32_1 = arith.constant 0 : i32
    return %c0_i32, %c0_i32_0 : i32, i32
  }
  func.func @transform_4(%arg0: i32) -> (i32, i32) {
    %c0_i32 = arith.constant 0 : i32
    %c0_i32_0 = arith.constant 0 : i32
    %c0_i32_1 = arith.constant 0 : i32
    return %c0_i32, %c0_i32_0 : i32, i32
  }
  func.func @transform_5(%arg0: i32) -> (i32, i32) {
    %c0_i32 = arith.constant 0 : i32
    %c0_i32_0 = arith.constant 0 : i32
    %c0_i32_1 = arith.constant 0 : i32
    return %c0_i32, %c0_i32_0 : i32, i32
  }
  func.func @transform_6(%arg0: i32) -> (i32, i32) {
    %c0_i32 = arith.constant 0 : i32
    %c0_i32_0 = arith.constant 0 : i32
    %c0_i32_1 = arith.constant 0 : i32
    return %c0_i32, %c0_i32_0 : i32, i32
  }
  func.func @transform_7(%arg0: i32) -> (i32, i32) {
    %c0_i32 = arith.constant 0 : i32
    %c0_i32_0 = arith.constant 0 : i32
    return %arg0, %c0_i32 : i32, i32
  }
}

</mosaic_0001>

<llo_original>
// kernel: tpu_custom_call.1
$region0: #{tpu_custom_call.1}
  #allocation0 [shape = 'u32[]', space=smem, size = 0x4, offset = 0x4, fixed_abs, tag = 'smem constant byte address 0x4 - core index']
  #allocation1 [shape = 'u32[144,128]{1,0:T(1,128)}', space=vmem, size = 0x12000, scoped, tag = 'internal scratch']
  %s0 = inlined_call_operand.hbm [shape: f32[8,32], index: 0, kind: input, shape index: {}]
  %s1 = inlined_call_operand.vmem [shape: bf16[32,32], index: 1, kind: input, shape index: {}]
  %s2 = inlined_call_operand.vmem [shape: f32[1,32], index: 2, kind: input, shape index: {}]
  %s3 = inlined_call_operand.hbm [shape: bf16[32,32], index: 3, kind: input, shape index: {}]
  %s4 = inlined_call_operand.vmem [shape: f32[1,32], index: 4, kind: input, shape index: {}]
  %s5 = inlined_call_operand.vmem [shape: bf16[32,2], index: 5, kind: input, shape index: {}]
  %s6 = inlined_call_operand.vmem [shape: f32[1,2], index: 6, kind: input, shape index: {}]
  %s7 = inlined_call_operand.vmem [shape: f32[8,2], index: 7, kind: output, shape index: {}]
  %s8 = sld [smem:[#allocation0]]
  $region46: #{tpu_custom_call.1} parent=0
    _
  %s10 = ssub.s32 1, %s8
  %s11 = scalar_select 0, %s10, %s8
  $region1: #{tpu_custom_call.1} parent=0
    #allocation2 [shape = 'u8[4096]{0}', space=vmem, size = 0x1000, scoped, tag = 'input window, operand 0, single buffered']
    #allocation3 [shape = 's32[1]{0}', space=sflag, size = 0x4, scoped, tag = 'scoped memory for tpu_custom_call.1']
    #allocation4 [shape = 'u8[8192]{0}', space=vmem, size = 0x2000, scoped, tag = 'input window, operand 3, single buffered']
    #allocation5 [shape = 's32[1]{0}', space=sflag, size = 0x4, scoped, tag = 'scoped memory for tpu_custom_call.1']
    %12 = vsyncpa [#allocation3], 0
    %13 = vsyncpa [#allocation5], 0
    // Predicated region
    $region2: #{tpu_custom_call.1} parent=1 // pred_check
      _
    $region3: #{tpu_custom_call.1} parent=1 // pred_check_branch
      %15 = sbr.rel (0) target = $region5
    $region4: #{tpu_custom_call.1} parent=1 // pred_region
      %s17 = ssub.s32 128, 128
      %18 = vsyncadd [#allocation3], %s17
      %s20 = sshll.u32 [#allocation2], 4
      %s21 = int_to_ptr.vmem [resolvable:$true] %s20
      %23 = dma.hbm_to_vmem [thread:$0]  %s0, 128, %s21, [#allocation3]
    $region5: #{tpu_custom_call.1} parent=1 // pred_fallthru
      _
    // Predicated region
    $region6: #{tpu_custom_call.1} parent=1 // pred_check
      _
    $region7: #{tpu_custom_call.1} parent=1 // pred_check_branch
      %25 = sbr.rel (0) target = $region9
    $region8: #{tpu_custom_call.1} parent=1 // pred_region
      _
    $region9: #{tpu_custom_call.1} parent=1 // pred_fallthru
      _
    // Predicated region
    $region10: #{tpu_custom_call.1} parent=1 // pred_check
      _
    $region11: #{tpu_custom_call.1} parent=1 // pred_check_branch
      %27 = sbr.rel (0) target = $region13
    $region12: #{tpu_custom_call.1} parent=1 // pred_region
      _
    $region13: #{tpu_custom_call.1} parent=1 // pred_fallthru
      _
    // Predicated region
    $region14: #{tpu_custom_call.1} parent=1 // pred_check
      _
    $region15: #{tpu_custom_call.1} parent=1 // pred_check_branch
      %29 = sbr.rel (0) target = $region17
    $region16: #{tpu_custom_call.1} parent=1 // pred_region
      %s31 = ssub.s32 256, 256
      %32 = vsyncadd [#allocation5], %s31
      %s33 = sshll.u32 [#allocation4], 4
      %s34 = int_to_ptr.vmem [resolvable:$true] %s33
      %39 = dma.hbm_to_vmem [thread:$0]  %s3, 256, %s34, [#allocation5], 64, 64, 4
    $region17: #{tpu_custom_call.1} parent=1 // pred_fallthru
      _
    // Predicated region
    $region18: #{tpu_custom_call.1} parent=1 // pred_check
      _
    $region19: #{tpu_custom_call.1} parent=1 // pred_check_branch
      %41 = sbr.rel (0) target = $region21
    $region20: #{tpu_custom_call.1} parent=1 // pred_region
      _
    $region21: #{tpu_custom_call.1} parent=1 // pred_fallthru
      _
    // Predicated region
    $region22: #{tpu_custom_call.1} parent=1 // pred_check
      _
    $region23: #{tpu_custom_call.1} parent=1 // pred_check_branch
      %43 = sbr.rel (0) target = $region25
    $region24: #{tpu_custom_call.1} parent=1 // pred_region
      _
    $region25: #{tpu_custom_call.1} parent=1 // pred_fallthru
      _
    // Predicated region
    $region26: #{tpu_custom_call.1} parent=1 // pred_check
      _
    $region27: #{tpu_custom_call.1} parent=1 // pred_check_branch
      %45 = sbr.rel (0) target = $region29
    $region28: #{tpu_custom_call.1} parent=1 // pred_region
      _
    $region29: #{tpu_custom_call.1} parent=1 // pred_fallthru
      _
    // Predicated region
    $region30: #{tpu_custom_call.1} parent=1 // pred_check
      _
    $region31: #{tpu_custom_call.1} parent=1 // pred_check_branch
      %47 = sbr.rel (0) target = $region33
    $region32: #{tpu_custom_call.1} parent=1 // pred_region
      %48 = dma.done [#allocation3], 128
    $region33: #{tpu_custom_call.1} parent=1 // pred_fallthru
      _
    // Predicated region
    $region34: #{tpu_custom_call.1} parent=1 // pred_check
      _
    $region35: #{tpu_custom_call.1} parent=1 // pred_check_branch
      %50 = sbr.rel (0) target = $region37
    $region36: #{tpu_custom_call.1} parent=1 // pred_region
      %51 = dma.done [#allocation5], 256
    $region37: #{tpu_custom_call.1} parent=1 // pred_fallthru
      _
    %v53 = vld [vmem:[#allocation2] sm:$0xff]
    %v54 = vpack.c.bf16 %v53, %v53
    %v55 = vld [vmem:[%s1] sm:$0xf]
    %v56 = vld [vmem:[%s1 + $0x4] sm:$0xf]
    %v57 = vld [vmem:[%s1 + $0x8] sm:$0xf]
    %v58 = vld [vmem:[%s1 + $0xc] sm:$0xf]
    %v59 = vld [vmem:[%s2] sm:$0x1]
    %v61 = vlaneseq
    %v62 = vshrl.u32 %v61, 7
    %v63 = vsub.s32 0, %v62
    %v64 = vrot.slane %v59, %v63
    %v70 = vunpack.c.l.b16 %v55
    %v71 = vunpack.c.l.b16 %v56
    %v72 = vunpack.c.l.b16 %v57
    %v73 = vunpack.c.l.b16 %v58
    %v74 = vpack.c.b16 %v71, %v70
    %v75 = vpack.c.b16 %v73, %v72
    %vm78 = vcmask 261120
    %v80 = vsel %vm78, %v54, 0
    %82 = vmatprep.subr.bf16.mxu0 0
    %83 = vmatpush1.bf16.msra.mxu0 %v74
    %84 = vmatprep.subr.bf16.mxu0 0
    %85 = vmatpush1.bf16.msra.mxu0 %v75
    %86 = vmatprep.subr.bf16.mxu0 0
    %87 = vmatpush1.bf16.msra.mxu0 0
    %88 = vmatprep.subr.bf16.mxu0 0
    %89 = vmatpush1.bf16.msra.mxu0 0
    %90 = vmatprep.subr.bf16.mxu0 0
    %91 = vmatpush1.bf16.msra.mxu0 0
    %92 = vmatprep.subr.bf16.mxu0 0
    %93 = vmatpush1.bf16.msra.mxu0 0
    %94 = vmatprep.subr.bf16.mxu0 0
    %95 = vmatpush1.bf16.msra.mxu0 0
    %96 = vmatprep.subr.bf16.mxu0 0
    %97 = vmatpush1.bf16.msra.mxu0 0
    %98 = vmatprep.subr.bf16.mxu0 0
    %99 = vmatpush1.bf16.msra.mxu0 0
    %100 = vmatprep.subr.bf16.mxu0 0
    %101 = vmatpush1.bf16.msra.mxu0 0
    %102 = vmatprep.subr.bf16.mxu0 0
    %103 = vmatpush1.bf16.msra.mxu0 0
    %104 = vmatprep.subr.bf16.mxu0 0
    %105 = vmatpush1.bf16.msra.mxu0 0
    %106 = vmatprep.subr.bf16.mxu0 0
    %107 = vmatpush1.bf16.msra.mxu0 0
    %108 = vmatprep.subr.bf16.mxu0 0
    %109 = vmatpush1.bf16.msra.mxu0 0
    %110 = vmatprep.subr.bf16.mxu0 0
    %111 = vmatpush1.bf16.msra.mxu0 0
    %112 = vmatprep.subr.bf16.mxu0 0
    %113 = vmatpush1.bf16.msra.mxu0 0
    %114 = vmatprep.mubr.bf16.mxu0 0
    %115 = vmatmul.mubr.bf16.gmra.mrb[0].mxu0 %v80
    %v116 = vpop.f32.mrb[0].mxu0
    %v117 = vadd.f32 %v64, %v116
    %v118 = vpop.f32.mrb[0].mxu0
    %v119 = vpop.f32.mrb[0].mxu0
    %v120 = vpop.f32.mrb[0].mxu0
    %121 = vdwg.mxu0
    %v122 = vmax.f32 %v117, 0.0
    %v123 = vpack.c.bf16 %v122, %v122
    %v124 = vld [vmem:[#allocation4] sm:$0xf]
    %v125 = vld [vmem:[#allocation4 + $0x4] sm:$0xf]
    %v126 = vld [vmem:[#allocation4 + $0x8] sm:$0xf]
    %v127 = vld [vmem:[#allocation4 + $0xc] sm:$0xf]
    %v128 = vld [vmem:[%s4] sm:$0x1]
    %v130 = vlaneseq
    %v131 = vshrl.u32 %v130, 7
    %v132 = vsub.s32 0, %v131
    %v133 = vrot.slane %v128, %v132
    %v139 = vunpack.c.l.b16 %v124
    %v140 = vunpack.c.l.b16 %v125
    %v141 = vunpack.c.l.b16 %v126
    %v142 = vunpack.c.l.b16 %v127
    %v143 = vpack.c.b16 %v140, %v139
    %v144 = vpack.c.b16 %v142, %v141
    %v148 = vsel %vm78, %v123, 0
    %150 = vmatprep.subr.bf16.mxu0 0
    %151 = vmatpush1.bf16.msra.mxu0 %v143
    %152 = vmatprep.subr.bf16.mxu0 0
    %153 = vmatpush1.bf16.msra.mxu0 %v144
    %154 = vmatprep.subr.bf16.mxu0 0
    %155 = vmatpush1.bf16.msra.mxu0 0
    %156 = vmatprep.subr.bf16.mxu0 0
    %157 = vmatpush1.bf16.msra.mxu0 0
    %158 = vmatprep.subr.bf16.mxu0 0
    %159 = vmatpush1.bf16.msra.mxu0 0
    %160 = vmatprep.subr.bf16.mxu0 0
    %161 = vmatpush1.bf16.msra.mxu0 0
    %162 = vmatprep.subr.bf16.mxu0 0
    %163 = vmatpush1.bf16.msra.mxu0 0
    %164 = vmatprep.subr.bf16.mxu0 0
    %165 = vmatpush1.bf16.msra.mxu0 0
    %166 = vmatprep.subr.bf16.mxu0 0
    %167 = vmatpush1.bf16.msra.mxu0 0
    %168 = vmatprep.subr.bf16.mxu0 0
    %169 = vmatpush1.bf16.msra.mxu0 0
    %170 = vmatprep.subr.bf16.mxu0 0
    %171 = vmatpush1.bf16.msra.mxu0 0
    %172 = vmatprep.subr.bf16.mxu0 0
    %173 = vmatpush1.bf16.msra.mxu0 0
    %174 = vmatprep.subr.bf16.mxu0 0
    %175 = vmatpush1.bf16.msra.mxu0 0
    %176 = vmatprep.subr.bf16.mxu0 0
    %177 = vmatpush1.bf16.msra.mxu0 0
    %178 = vmatprep.subr.bf16.mxu0 0
    %179 = vmatpush1.bf16.msra.mxu0 0
    %180 = vmatprep.subr.bf16.mxu0 0
    %181 = vmatpush1.bf16.msra.mxu0 0
    %182 = vmatprep.mubr.bf16.mxu0 0
    %183 = vmatmul.mubr.bf16.gmra.mrb[0].mxu0 %v148
    %v184 = vpop.f32.mrb[0].mxu0
    %v185 = vadd.f32 %v133, %v184
    %v186 = vpop.f32.mrb[0].mxu0
    %v187 = vpop.f32.mrb[0].mxu0
    %v188 = vpop.f32.mrb[0].mxu0
    %189 = vdwg.mxu0
    %v190 = vmax.f32 %v185, 0.0
    %v191 = vpack.c.bf16 %v190, %v190
    %v192 = vld [vmem:[%s5] sm:$0xf]
    %v193 = vld [vmem:[%s5 + $0x4] sm:$0xf]
    %v194 = vld [vmem:[%s5 + $0x8] sm:$0xf]
    %v195 = vld [vmem:[%s5 + $0xc] sm:$0xf]
    %v196 = vld [vmem:[%s6] sm:$0x1]
    %v198 = vlaneseq
    %v199 = vshrl.u32 %v198, 7
    %v200 = vsub.s32 0, %v199
    %v201 = vrot.slane %v196, %v200
    %v207 = vunpack.c.l.b16 %v192
    %v208 = vunpack.c.l.b16 %v193
    %v209 = vunpack.c.l.b16 %v194
    %v210 = vunpack.c.l.b16 %v195
    %v211 = vpack.c.b16 %v208, %v207
    %v212 = vpack.c.b16 %v210, %v209
    %v216 = vsel %vm78, %v191, 0
    %218 = vmatprep.subr.bf16.mxu0 0
    %219 = vmatpush1.bf16.msra.mxu0 %v211
    %220 = vmatprep.subr.bf16.mxu0 0
    %221 = vmatpush1.bf16.msra.mxu0 %v212
    %222 = vmatprep.subr.bf16.mxu0 0
    %223 = vmatpush1.bf16.msra.mxu0 0
    %224 = vmatprep.subr.bf16.mxu0 0
    %225 = vmatpush1.bf16.msra.mxu0 0
    %226 = vmatprep.subr.bf16.mxu0 0
    %227 = vmatpush1.bf16.msra.mxu0 0
    %228 = vmatprep.subr.bf16.mxu0 0
    %229 = vmatpush1.bf16.msra.mxu0 0
    %230 = vmatprep.subr.bf16.mxu0 0
    %231 = vmatpush1.bf16.msra.mxu0 0
    %232 = vmatprep.subr.bf16.mxu0 0
    %233 = vmatpush1.bf16.msra.mxu0 0
    %234 = vmatprep.subr.bf16.mxu0 0
    %235 = vmatpush1.bf16.msra.mxu0 0
    %236 = vmatprep.subr.bf16.mxu0 0
    %237 = vmatpush1.bf16.msra.mxu0 0
    %238 = vmatprep.subr.bf16.mxu0 0
    %239 = vmatpush1.bf16.msra.mxu0 0
    %240 = vmatprep.subr.bf16.mxu0 0
    %241 = vmatpush1.bf16.msra.mxu0 0
    %242 = vmatprep.subr.bf16.mxu0 0
    %243 = vmatpush1.bf16.msra.mxu0 0
    %244 = vmatprep.subr.bf16.mxu0 0
    %245 = vmatpush1.bf16.msra.mxu0 0
    %246 = vmatprep.subr.bf16.mxu0 0
    %247 = vmatpush1.bf16.msra.mxu0 0
    %248 = vmatprep.subr.bf16.mxu0 0
    %249 = vmatpush1.bf16.msra.mxu0 0
    %250 = vmatprep.mubr.bf16.mxu0 0
    %251 = vmatmul.mubr.bf16.gmra.mrb[0].mxu0 %v216
    %v252 = vpop.f32.mrb[0].mxu0
    %v253 = vadd.f32 %v201, %v252
    %v254 = vpop.f32.mrb[0].mxu0
    %v255 = vpop.f32.mrb[0].mxu0
    %v256 = vpop.f32.mrb[0].mxu0
    %257 = vdwg.mxu0
    %v258 = vxor.u32 %v253, 2147483648
    %v259 = vmul.f32 %v258, 1.442695
    %v260 = vpow.pop %v259
    %v261 = vadd.f32 %v260, 1.0
    %v262 = vrcp.pop %v261
    %v263 = vmul.f32 1.0, %v262
    %265 = vrot.lane.b32.xlu0 %v263, 1
    %v266 = vpop.permute.xlu0 %265
    %v268 = vsub.f32 %v263, %v266
    %v269 = vmax.f32 %v268, 0.0
    %vm270 = vcmp.ne.f32.partialorder %v268, %v268
    %v271 = vadd.f32 %v268, 0.0
    %v272 = vand.u32 2147483647, %v268
    %v273 = vsub.f32 0.0, %v272
    %v274 = vmul.f32 %v273, 1.442695
    %v275 = vpow.pop %v274
    %v276 = vadd.f32 %v275, 1.0
    %v277 = vlog2.pop %v276
    %v278 = vmul.f32 %v277, 0.6931472
    %v279 = vmul.f32 -0.5, %v275
    %v280 = vadd.f32 %v279, 1.0
    %v281 = vmul.f32 %v280, %v275
    %v282 = vand.u32 2147483647, %v275
    %vm283 = vcmp.lt.f32.partialorder %v282, 0.0004427343
    %v284 = vsel %vm283, %v281, %v278
    %v285 = vadd.f32 %v269, %v284
    %v286 = vsel %vm270, %v271, %v285
    %v287 = vsub.f32 0.0, %v286
    %v288 = vadd.f32 %v287, %v268
    %290 = vrot.lane.b32.xlu0 %v287, 127
    %v291 = vpop.permute.xlu0 %290
    %vm293 = vcmask 7168
    %v294 = vsel %vm293, %v291, %v288
    %vm295 = vcmask 15360
    %296 = vst.msk [vmem:[%s7] sm:$0xff] %vm295, %v294
    // Predicated region
    $region38: #{tpu_custom_call.1} parent=1 // pred_check
      _
    $region39: #{tpu_custom_call.1} parent=1 // pred_check_branch
      %298 = sbr.rel (0) target = $region41
    $region40: #{tpu_custom_call.1} parent=1 // pred_region
      _
    $region41: #{tpu_custom_call.1} parent=1 // pred_fallthru
      _
    // Predicated region
    $region42: #{tpu_custom_call.1} parent=1 // pred_check
      _
    $region43: #{tpu_custom_call.1} parent=1 // pred_check_branch
      %300 = sbr.rel (0) target = $region45
    $region44: #{tpu_custom_call.1} parent=1 // pred_region
      _
    $region45: #{tpu_custom_call.1} parent=1 // pred_fallthru
      _
    %301 = vsyncpa [#allocation3], 1
    %302 = vsyncpa [#allocation5], 1

</llo_original>
